<compile_context>
chip_gen: v6e
topology: v6e:2x2x1
jax: 0.10.0
libtpu: 0.0.40
codegen_flags: <defaults>
</compile_context>

<pallas_src>
import jax
import jax.numpy as jnp
from jax import lax
from jax.experimental import pallas as pl
from jax.experimental.pallas import tpu as pltpu


_MIB = 1024 * 1024
_VMEM_BLOCK_BUDGET = 40 * _MIB   # target for double-buffered block footprint
_VMEM_LIMIT_BYTES = 48 * _MIB    # < v7x 64 MiB physical; fine on v5e/v6e (128 MiB)


def _merged_matmul_bias_kernel(p_ref, w_ref, bias_ref, o_ref):
    """One M-tile of   out = patches @ W_eff + bias   (f32 accumulation)."""
    acc = jnp.dot(p_ref[...], w_ref[...],
                  preferred_element_type=jnp.float32)        # (TM, Cout_pad)
    o_ref[...] = (acc + bias_ref[...]).astype(o_ref.dtype)   # bias add in f32


def _round_up(v, m):
    return ((v + m - 1) // m) * m


def _im2col_nhwc(x_nchw, kh, kw, stride, pad, dtype):
    """x: (N, C, H, W) -> (N*OH*OW, kh*kw*C) patches in `dtype`.

    K ordering within a patch is (kh, kw, C); the weight reshapes below are
    permuted to match, avoiding a big 6-D transpose of the activation tensor.
    """
    n, c, h, w = x_nchw.shape
    x = jnp.transpose(x_nchw, (0, 2, 3, 1)).astype(dtype)             # NHWC
    xp = jnp.pad(x, ((0, 0), (pad, pad), (pad, pad), (0, 0)))
    oh = (h + 2 * pad - kh) // stride + 1
    ow = (w + 2 * pad - kw) // stride + 1
    cols = [xp[:, i:i + stride * oh:stride, j:j + stride * ow:stride, :]
            for i in range(kh) for j in range(kw)]                    # (N,OH,OW,C)
    patches = jnp.concatenate(cols, axis=-1)                          # (N,OH,OW,kh*kw*C)
    return patches.reshape(n * oh * ow, kh * kw * c), oh, ow


def _block_vmem_bytes(tile_m, k_pad, cout_pad, cdt_bytes, out_bytes, w_bufs):
    patches = 2 * tile_m * k_pad * cdt_bytes            # double-buffered input
    weights = w_bufs * k_pad * cout_pad * cdt_bytes     # resident merged weight
    bias = w_bufs * cout_pad * 4                        # f32 bias row
    out = 2 * tile_m * cout_pad * out_bytes             # double-buffered output
    return patches + weights + bias + out


def mmtuning_conv2d_forward(x, w_base, bias, w_a1, w_b1, w_a2, w_b2, *,
                            stride, padding, scaling, tile_m=512,
                            compute_dtype=None, nchw_output=True):
    """x: (N, Cin, H, W) NCHW.  Weights in PyTorch layouts:
       w_base: (Cout, Cin, KH, KW), bias: (Cout,),
       w_a*:   (r, Cin, KH, KW),    w_b*: (Cout, r, 1, 1)."""
    n, cin, h, w = x.shape
    cout, _, kh, kw = w_base.shape
    r = w_a1.shape[0]
    out_dtype = x.dtype
    if compute_dtype is None:
        compute_dtype = x.dtype
    k = cin * kh * kw

    # ---- fold LoRA branches into the base weight (f32, accurate) ----
    # torch.stack([o1, o2]).mean(0) == 0.5*(o1+o2); each o_i carries `scaling`.
    wb = jnp.transpose(w_base, (0, 2, 3, 1)).reshape(cout, k).T.astype(jnp.float32)
    a_cat = jnp.concatenate(
        [jnp.transpose(w_a1, (0, 2, 3, 1)).reshape(r, k),
         jnp.transpose(w_a2, (0, 2, 3, 1)).reshape(r, k)],
        axis=0).T.astype(jnp.float32)                                  # (K, 2r)
    b_cat = jnp.concatenate(
        [w_b1.reshape(cout, r).T, w_b2.reshape(cout, r).T],
        axis=0).astype(jnp.float32)                                    # (2r, Cout)
    b_cat = b_cat * jnp.float32(0.5 * scaling)
    w_eff = wb + jnp.dot(a_cat, b_cat, precision=lax.Precision.HIGHEST)  # (K, Cout)

    # ---- lane/sublane alignment: pad K and Cout to multiples of 128 ----
    k_pad = _round_up(k, 128)
    cout_pad = _round_up(cout, 128)
    w_eff = jnp.pad(w_eff, ((0, k_pad - k),
                            (0, cout_pad - cout))).astype(compute_dtype)
    bias2 = jnp.pad(bias.reshape(1, cout).astype(jnp.float32),
                    ((0, 0), (0, cout_pad - cout)))                    # f32 bias row

    # ---- im2col in compute dtype, (kh, kw, C) K-ordering, pad K columns ----
    patches, oh, ow = _im2col_nhwc(x, kh, kw, stride, padding, compute_dtype)
    m = patches.shape[0]
    if k_pad != k:
        patches = jnp.pad(patches, ((0, 0), (0, k_pad - k)))

    # ---- tile_m selection: sublane aligned, >=2 tiles, fits VMEM budget ----
    cdt_bytes = jnp.dtype(compute_dtype).itemsize
    out_bytes = jnp.dtype(out_dtype).itemsize
    tile_m = max(8, _round_up(min(tile_m, m), 8))
    if m > 8:
        # >= 2 M tiles so v7x can shard the parallel axis over both TCs.
        tile_m = min(tile_m, _round_up(-(-m // 2), 8))
    while tile_m > 8 and _block_vmem_bytes(
            tile_m, k_pad, cout_pad, cdt_bytes, out_bytes, 1) > _VMEM_BLOCK_BUDGET:
        tile_m = _round_up(tile_m // 2, 8)

    m_pad = _round_up(m, tile_m)
    if m_pad != m:
        patches = jnp.pad(patches, ((0, m_pad - m), (0, 0)))
    grid = (m_pad // tile_m,)

    def run(single_buffer_weights):
        const_kw = ({"pipeline_mode": pl.Buffered(1)}
                    if single_buffer_weights else {})
        return pl.pallas_call(
            _merged_matmul_bias_kernel,
            out_shape=jax.ShapeDtypeStruct((m_pad, cout_pad), out_dtype),
            grid_spec=pltpu.PrefetchScalarGridSpec(
                num_scalar_prefetch=0,
                grid=grid,
                in_specs=[
                    # activation patches: march along M
                    pl.BlockSpec((tile_m, k_pad), lambda i: (i, 0)),
                    # merged weight / bias: constant block index -> resident
                    pl.BlockSpec((k_pad, cout_pad), lambda i: (0, 0), **const_kw),
                    pl.BlockSpec((1, cout_pad), lambda i: (0, 0), **const_kw),
                ],
                out_specs=pl.BlockSpec((tile_m, cout_pad), lambda i: (i, 0)),
            ),
            compiler_params=pltpu.CompilerParams(
                dimension_semantics=("parallel",),       # v7x: shard M over 2 TCs
                vmem_limit_bytes=_VMEM_LIMIT_BYTES),
        )(patches, w_eff, bias2)

    try:
        out = run(True)
    except Exception:
        # pl.Buffered(1) on constant-index blocks is a pure VMEM saving; fall
        # back to default double-buffering if this jax build rejects it.
        out = run(False)

    out = out[:m, :cout]                                 # strip pads
    out = out.reshape(n, oh, ow, cout)                   # NHWC
    if nchw_output:
        out = out.transpose(0, 3, 1, 2)                  # match PyTorch NCHW
    return out


def _reference_forward(x, w_base, bias, w_a1, w_b1, w_a2, w_b2,
                       *, stride, padding, scaling):
    """Pure-JAX reference (lax conv, un-merged LoRA) for correctness check."""
    def conv(inp, wt, s, p):
        return lax.conv_general_dilated(
            inp, wt, (s, s), ((p, p), (p, p)),
            dimension_numbers=("NCHW", "OIHW", "NCHW"),
            precision=lax.Precision.HIGHEST)
    base = conv(x, w_base, stride, padding) + bias.reshape(1, -1, 1, 1)
    o1 = conv(conv(x, w_a1, stride, padding), w_b1, 1, 0)
    o2 = conv(conv(x, w_a2, stride, padding), w_b2, 1, 0)
    return base + 0.5 * scaling * (o1 + o2)


if __name__ == "__main__":
    # Small, deterministic configuration consistent with the module.
    N, Cin, H, W = 2, 4, 16, 16
    Cout = 8
    KH = KW = 3
    stride, padding = 1, 1
    r, lora_alpha = 4, 8
    scaling = lora_alpha / r   # 2.0

    key = jax.random.PRNGKey(0)
    kx, kw_, kb, ka1, kb1, ka2, kb2 = jax.random.split(key, 7)

    x = jax.random.normal(kx, (N, Cin, H, W), dtype=jnp.float32)
    w_base = jax.random.normal(kw_, (Cout, Cin, KH, KW), dtype=jnp.float32) * 0.1
    bias = jax.random.normal(kb, (Cout,), dtype=jnp.float32) * 0.1
    w_a1 = jax.random.normal(ka1, (r, Cin, KH, KW), dtype=jnp.float32) * 0.1
    w_b1 = jax.random.normal(kb1, (Cout, r, 1, 1), dtype=jnp.float32) * 0.1
    w_a2 = jax.random.normal(ka2, (r, Cin, KH, KW), dtype=jnp.float32) * 0.1
    w_b2 = jax.random.normal(kb2, (Cout, r, 1, 1), dtype=jnp.float32) * 0.1

    ref = _reference_forward(
        x, w_base, bias, w_a1, w_b1, w_a2, w_b2,
        stride=stride, padding=padding, scaling=scaling)
    ref = jax.block_until_ready(ref)

    # --- f32 compute path (merged weight, f32 MXU, tight tolerance) ---
    out_f32 = mmtuning_conv2d_forward(
        x, w_base, bias, w_a1, w_b1, w_a2, w_b2,
        stride=stride, padding=padding, scaling=scaling,
        compute_dtype=jnp.float32)
    out_f32 = jax.block_until_ready(out_f32)
    assert out_f32.shape == (N, Cout, H, W), out_f32.shape
    assert jnp.allclose(out_f32, ref, rtol=1e-4, atol=1e-4), float(
        jnp.max(jnp.abs(out_f32 - ref)))

    # --- bf16 compute path (MXU-optimal operands, f32 accumulation) ---
    out_bf16 = mmtuning_conv2d_forward(
        x, w_base, bias, w_a1, w_b1, w_a2, w_b2,
        stride=stride, padding=padding, scaling=scaling,
        compute_dtype=jnp.bfloat16)
    out_bf16 = jax.block_until_ready(out_bf16)
    assert out_bf16.shape == (N, Cout, H, W), out_bf16.shape
    assert jnp.allclose(out_bf16, ref, rtol=5e-2, atol=5e-2), float(
        jnp.max(jnp.abs(out_bf16 - ref)))

    print("KERNEL_OK")
</pallas_src>

<mosaic_0001>
module attributes {stable_mosaic.version = 11 : i64} {
  func.func @_merged_matmul_bias_kernel(%arg0: i32, %arg1: memref<256x128xf32, #tpu.memory_space<vmem>>, %arg2: memref<128x128xf32, #tpu.memory_space<vmem>>, %arg3: memref<1x128xf32, #tpu.memory_space<vmem>>, %arg4: memref<256x128xf32, #tpu.memory_space<vmem>>) attributes {dimension_semantics = [#tpu.dimension_semantics<parallel>], iteration_bounds = array<i64: 2>, scalar_prefetch = 0 : i64, scratch_operands = 0 : i64, tpu.core_type = #tpu.core_type<tc>, window_params = [{transform_indices = @transform_0, window_bounds = array<i64: 256, 128>}, {pipeline_mode = #tpu.pipeline_mode<synchronous>, transform_indices = @transform_1, window_bounds = array<i64: 128, 128>}, {pipeline_mode = #tpu.pipeline_mode<synchronous>, transform_indices = @transform_2, window_bounds = array<i64: 1, 128>}, {transform_indices = @transform_3, window_bounds = array<i64: 256, 128>}]} {
    %c0 = arith.constant 0 : index
    %c0_0 = arith.constant 0 : index
    %0 = vector.load %arg1[%c0, %c0_0] : memref<256x128xf32, #tpu.memory_space<vmem>>, vector<256x128xf32>
    %c0_1 = arith.constant 0 : index
    %c0_2 = arith.constant 0 : index
    %1 = vector.load %arg2[%c0_1, %c0_2] : memref<128x128xf32, #tpu.memory_space<vmem>>, vector<128x128xf32>
    %cst = arith.constant dense<0.000000e+00> : vector<256x128xf32>
    %2 = tpu.matmul %0, %1, %cst {dimension_numbers = #tpu.dot_dimension_numbers<[1], [0], [0], [1], [0, 0, 1, 1], [], []>} : vector<256x128xf32>, vector<128x128xf32>, vector<256x128xf32> -> vector<256x128xf32>
    %c0_3 = arith.constant 0 : index
    %c0_4 = arith.constant 0 : index
    %3 = vector.load %arg3[%c0_3, %c0_4] : memref<1x128xf32, #tpu.memory_space<vmem>>, vector<1x128xf32>
    %4 = vector.broadcast %3 : vector<1x128xf32> to vector<256x128xf32>
    %5 = arith.addf %2, %4 : vector<256x128xf32>
    %c0_5 = arith.constant 0 : index
    %c0_6 = arith.constant 0 : index
    %6 = vector.load %arg4[%c0_5, %c0_6] : memref<256x128xf32, #tpu.memory_space<vmem>>, vector<256x128xf32>
    tpu.vector_store %arg4[%c0_5, %c0_6], %5 {strides = array<i32>} : memref<256x128xf32, #tpu.memory_space<vmem>>, vector<256x128xf32>,
    return
  }
  func.func @transform_0(%arg0: i32) -> (i32, i32) {
    %c0_i32 = arith.constant 0 : i32
    %c0_i32_0 = arith.constant 0 : i32
    return %arg0, %c0_i32 : i32, i32
  }
  func.func @transform_1(%arg0: i32) -> (i32, i32) {
    %c0_i32 = arith.constant 0 : i32
    %c0_i32_0 = arith.constant 0 : i32
    %c0_i32_1 = arith.constant 0 : i32
    return %c0_i32, %c0_i32_0 : i32, i32
  }
  func.func @transform_2(%arg0: i32) -> (i32, i32) {
    %c0_i32 = arith.constant 0 : i32
    %c0_i32_0 = arith.constant 0 : i32
    %c0_i32_1 = arith.constant 0 : i32
    return %c0_i32, %c0_i32_0 : i32, i32
  }
  func.func @transform_3(%arg0: i32) -> (i32, i32) {
    %c0_i32 = arith.constant 0 : i32
    %c0_i32_0 = arith.constant 0 : i32
    return %arg0, %c0_i32 : i32, i32
  }
}

module attributes {stable_mosaic.version = 11 : i64} {
  func.func @_merged_matmul_bias_kernel(%arg0: i32, %arg1: memref<256x128xf32, #tpu.memory_space<vmem>>, %arg2: memref<128x128xf32, #tpu.memory_space<vmem>>, %arg3: memref<1x128xf32, #tpu.memory_space<vmem>>, %arg4: memref<256x128xf32, #tpu.memory_space<vmem>>) attributes {dimension_semantics = [#tpu.dimension_semantics<parallel>], iteration_bounds = array<i64: 2>, scalar_prefetch = 0 : i64, scratch_operands = 0 : i64, tpu.core_type = #tpu.core_type<tc>, window_params = [{transform_indices = @transform_0, window_bounds = array<i64: 256, 128>}, {pipeline_mode = #tpu.pipeline_mode<synchronous>, transform_indices = @transform_1, window_bounds = array<i64: 128, 128>}, {pipeline_mode = #tpu.pipeline_mode<synchronous>, transform_indices = @transform_2, window_bounds = array<i64: 1, 128>}, {transform_indices = @transform_3, window_bounds = array<i64: 256, 128>}]} {
    %c0 = arith.constant 0 : index
    %c0_0 = arith.constant 0 : index
    %0 = vector.load %arg1[%c0, %c0_0] : memref<256x128xf32, #tpu.memory_space<vmem>>, vector<256x128xf32>
    %c0_1 = arith.constant 0 : index
    %c0_2 = arith.constant 0 : index
    %1 = vector.load %arg2[%c0_1, %c0_2] : memref<128x128xf32, #tpu.memory_space<vmem>>, vector<128x128xf32>
    %cst = arith.constant dense<0.000000e+00> : vector<256x128xf32>
    %2 = tpu.matmul %0, %1, %cst {dimension_numbers = #tpu.dot_dimension_numbers<[1], [0], [0], [1], [0, 0, 1, 1], [], []>} : vector<256x128xf32>, vector<128x128xf32>, vector<256x128xf32> -> vector<256x128xf32>
    %c0_3 = arith.constant 0 : index
    %c0_4 = arith.constant 0 : index
    %3 = vector.load %arg3[%c0_3, %c0_4] : memref<1x128xf32, #tpu.memory_space<vmem>>, vector<1x128xf32>
    %4 = vector.broadcast %3 : vector<1x128xf32> to vector<256x128xf32>
    %5 = arith.addf %2, %4 : vector<256x128xf32>
    %c0_5 = arith.constant 0 : index
    %c0_6 = arith.constant 0 : index
    %6 = vector.load %arg4[%c0_5, %c0_6] : memref<256x128xf32, #tpu.memory_space<vmem>>, vector<256x128xf32>
    tpu.vector_store %arg4[%c0_5, %c0_6], %5 {strides = array<i32>} : memref<256x128xf32, #tpu.memory_space<vmem>>, vector<256x128xf32>,
    return
  }
  func.func @transform_0(%arg0: i32) -> (i32, i32) {
    %c0_i32 = arith.constant 0 : i32
    %c0_i32_0 = arith.constant 0 : i32
    return %arg0, %c0_i32 : i32, i32
  }
  func.func @transform_1(%arg0: i32) -> (i32, i32) {
    %c0_i32 = arith.constant 0 : i32
    %c0_i32_0 = arith.constant 0 : i32
    %c0_i32_1 = arith.constant 0 : i32
    return %c0_i32, %c0_i32_0 : i32, i32
  }
  func.func @transform_2(%arg0: i32) -> (i32, i32) {
    %c0_i32 = arith.constant 0 : i32
    %c0_i32_0 = arith.constant 0 : i32
    %c0_i32_1 = arith.constant 0 : i32
    return %c0_i32, %c0_i32_0 : i32, i32
  }
  func.func @transform_3(%arg0: i32) -> (i32, i32) {
    %c0_i32 = arith.constant 0 : i32
    %c0_i32_0 = arith.constant 0 : i32
    return %arg0, %c0_i32 : i32, i32
  }
}

</mosaic_0001>

<llo_original>
// kernel: tpu_custom_call.1
$region0: #{tpu_custom_call.1}
  #allocation0 [shape = 'u32[]', space=smem, size = 0x4, offset = 0x4, fixed_abs, tag = 'smem constant byte address 0x4 - core index']
  #allocation1 [shape = 'u32[144,128]{1,0:T(1,128)}', space=vmem, size = 0x12000, scoped, tag = 'internal scratch']
  %s0 = inlined_call_operand.hbm [shape: f32[512,128], index: 0, kind: input, shape index: {}]
  %s1 = inlined_call_operand.hbm [shape: f32[128,128], index: 1, kind: input, shape index: {}]
  %s2 = inlined_call_operand.vmem [shape: f32[1,128], index: 2, kind: input, shape index: {}]
  %s3 = inlined_call_operand.hbm [shape: f32[512,128], index: 3, kind: output, shape index: {}]
  %s4 = sld [smem:[#allocation0]]
  $region53: #{tpu_custom_call.1} parent=0
    _
  %s6 = ssub.s32 1, %s4
  %s7 = scalar_select 0, %s6, %s4
  $region1: #{tpu_custom_call.1} parent=0
    #allocation2 [shape = 'u8[262144]{0}', space=vmem, size = 0x40000, scoped, tag = 'input window, operand 0']
    #allocation3 [shape = 's32[2]{0}', space=sflag, size = 0x8, scoped, tag = 'scoped memory for tpu_custom_call.1']
    #allocation4 [shape = 's32[2]{0}', space=sflag, size = 0x8, scoped, tag = 'scoped memory for tpu_custom_call.1']
    #allocation5 [shape = 'u8[65536]{0}', space=vmem, size = 0x10000, scoped, tag = 'input window, operand 1, single buffered']
    #allocation6 [shape = 's32[1]{0}', space=sflag, size = 0x4, scoped, tag = 'scoped memory for tpu_custom_call.1']
    #allocation7 [shape = 'u8[262144]{0}', space=vmem, size = 0x40000, scoped, tag = 'output window, operand 0']
    %8 = vsyncpa [#allocation3], 0
    %s9 = scalar_lea.sflag [#allocation3], 1
    %10 = vsyncpa %s9, 0
    %11 = vsyncpa [#allocation6], 0
    %12 = vsyncpa [#allocation4], 0
    %s13 = scalar_lea.sflag [#allocation4], 1
    %14 = vsyncpa %s13, 0
    loop: start=0, step=1, limit=4
    $region2: #{tpu_custom_call.1} parent=1 // loop_pre_header
      _
    $region3: #{tpu_custom_call.1} parent=1 // loop_header
      %s16 = sphi 0, %s20
      %p17 = scmp.ge.s32.totalorder %s16, 4
      %s26 = sphi 0, %s28
      %s29 = sphi 0, %s26
      %s30 = sphi 0, %s29
      %s46 = sphi 0, %s30
      %s50 = sphi 0, %s50
      %s52 = sphi 0, %s50
      %s53 = sphi 0, %s52
      %s67 = sphi 0, %s53
      %s71 = sphi 0, %s71
      %s73 = sphi 0, %s71
      %s74 = sphi 0, %s73
      %s88 = sphi 0, %s74
      %s94 = sphi 0, %s96
      %s97 = sphi 0, %s94
      %s98 = sphi 0, %s97
      %s114 = sphi 0, %s98
    $region4: #{tpu_custom_call.1} parent=1 // loop_header_branch
      %19 = sbr.rel (%p17) target = $region8
    $region5: #{tpu_custom_call.1} parent=1 // loop_body
      %s21 = ssub.s32 %s16, 1
      %s22 = ssub.s32 %s16, 2
      %s23 = sadd.s32 %s16, 1
      %s24 = ssub.s32 %s16, %s23
      %p25 = scmp.eq.s32.totalorder %s24, 0
      %s27 = sadd.s32 %s26, 1
      %s28 = scalar_select %p25, %s26, %s27
      %p31 = pneg %p25
      %p32 = scmp.eq.s32.totalorder %s16, 1
      %p33 = por %p31, %p32
      %p34 = scmp.ne.s32.totalorder %s26, %s29
      %p35 = scmp.eq.s32.totalorder %s16, 0
      %p36 = por %p34, %p35
      %p37 = scmp.ne.s32.totalorder %s26, %s29
      %p38 = scmp.eq.s32.totalorder %s21, 1
      %p39 = por %p37, %p38
      %p40 = scmp.ne.s32.totalorder %s29, %s30
      %p41 = scmp.eq.s32.totalorder %s21, 0
      %p42 = por %p40, %p41
      %p43 = scmp.ne.s32.totalorder %s29, %s30
      %p44 = scmp.eq.s32.totalorder %s22, 1
      %p45 = por %p43, %p44
      %p47 = scmp.ne.s32.totalorder %s30, %s46
      %p48 = scmp.eq.s32.totalorder %s22, 0
      %p49 = por %p47, %p48
      %s51 = sadd.s32 %s50, 1
      %p54 = scmp.eq.s32.totalorder %s16, 1
      %p55 = scmp.ne.s32.totalorder %s50, %s52
      %p56 = scmp.eq.s32.totalorder %s16, 0
      %p57 = por %p55, %p56
      %p58 = scmp.ne.s32.totalorder %s50, %s52
      %p59 = scmp.eq.s32.totalorder %s21, 1
      %p60 = por %p58, %p59
      %p61 = scmp.ne.s32.totalorder %s52, %s53
      %p62 = scmp.eq.s32.totalorder %s21, 0
      %p63 = por %p61, %p62
      %p64 = scmp.ne.s32.totalorder %s52, %s53
      %p65 = scmp.eq.s32.totalorder %s22, 1
      %p66 = por %p64, %p65
      %p68 = scmp.ne.s32.totalorder %s53, %s67
      %p69 = scmp.eq.s32.totalorder %s22, 0
      %p70 = por %p68, %p69
      %s72 = sadd.s32 %s71, 1
      %p75 = scmp.eq.s32.totalorder %s16, 1
      %p76 = scmp.ne.s32.totalorder %s71, %s73
      %p77 = scmp.eq.s32.totalorder %s16, 0
      %p78 = por %p76, %p77
      %p79 = scmp.ne.s32.totalorder %s71, %s73
      %p80 = scmp.eq.s32.totalorder %s21, 1
      %p81 = por %p79, %p80
      %p82 = scmp.ne.s32.totalorder %s73, %s74
      %p83 = scmp.eq.s32.totalorder %s21, 0
      %p84 = por %p82, %p83
      %p85 = scmp.ne.s32.totalorder %s73, %s74
      %p86 = scmp.eq.s32.totalorder %s22, 1
      %p87 = por %p85, %p86
      %p89 = scmp.ne.s32.totalorder %s74, %s88
      %p90 = scmp.eq.s32.totalorder %s22, 0
      %p91 = por %p89, %p90
      %s92 = ssub.s32 %s16, %s23
      %p93 = scmp.eq.s32.totalorder %s92, 0
      %s95 = sadd.s32 %s94, 1
      %s96 = scalar_select %p93, %s94, %s95
      %p99 = pneg %p93
      %p100 = scmp.eq.s32.totalorder %s16, 1
      %p101 = por %p99, %p100
      %p102 = scmp.ne.s32.totalorder %s94, %s97
      %p103 = scmp.eq.s32.totalorder %s16, 0
      %p104 = por %p102, %p103
      %p105 = scmp.ne.s32.totalorder %s94, %s97
      %p106 = scmp.eq.s32.totalorder %s21, 1
      %p107 = por %p105, %p106
      %p108 = scmp.ne.s32.totalorder %s97, %s98
      %p109 = scmp.eq.s32.totalorder %s21, 0
      %p110 = por %p108, %p109
      %p111 = scmp.ne.s32.totalorder %s97, %s98
      %p112 = scmp.eq.s32.totalorder %s22, 1
      %p113 = por %p111, %p112
      %p115 = scmp.ne.s32.totalorder %s98, %s114
      %p116 = scmp.eq.s32.totalorder %s22, 0
      %p117 = por %p115, %p116
      %p118 = scmp.le.s32.totalorder 1, %s16
      %p119 = scmp.lt.s32.totalorder %s16, 3
      %p120 = pnand %p118, %p119
      %p121 = pneg %p120
      // Predicated region
      $region9: #{tpu_custom_call.1} parent=5 // pred_check
        _
      $region10: #{tpu_custom_call.1} parent=5 // pred_check_branch
        %123 = sbr.rel (%p120) target = $region12
      $region11: #{tpu_custom_call.1} parent=5 // pred_region
        %s124 = ssub.s32 %s16, 1
        // Predicated region
        $region13: #{tpu_custom_call.1} parent=11 // pred_check
          %p125 = pneg %p63
        $region14: #{tpu_custom_call.1} parent=11 // pred_check_branch
          %127 = sbr.rel (%p125) target = $region16
        $region15: #{tpu_custom_call.1} parent=11 // pred_region
          %s129 = ssub.s32 2048, 2048
          %130 = vsyncadd [#allocation6], %s129
          %s131 = sshll.u32 [#allocation5], 4
          %s132 = int_to_ptr.vmem [resolvable:$true] %s131
          %137 = dma.hbm_to_vmem [thread:$0]  %s1, 2048, %s132, [#allocation6], 128, 128, 8
        $region16: #{tpu_custom_call.1} parent=11 // pred_fallthru
          _
        // Predicated region
        $region17: #{tpu_custom_call.1} parent=11 // pred_check
          %p138 = pneg %p84
        $region18: #{tpu_custom_call.1} parent=11 // pred_check_branch
          %140 = sbr.rel (%p138) target = $region20
        $region19: #{tpu_custom_call.1} parent=11 // pred_region
          _
        $region20: #{tpu_custom_call.1} parent=11 // pred_fallthru
          _
      $region12: #{tpu_custom_call.1} parent=5 // pred_fallthru
        _
      %p141 = scmp.lt.s32.totalorder %s16, 2
      // Predicated region
      $region21: #{tpu_custom_call.1} parent=5 // pred_check
        %p142 = pneg %p141
      $region22: #{tpu_custom_call.1} parent=5 // pred_check_branch
        %144 = sbr.rel (%p142) target = $region24
      $region23: #{tpu_custom_call.1} parent=5 // pred_region
        // Predicated region
        $region25: #{tpu_custom_call.1} parent=23 // pred_check
          %p145 = pneg %p36
        $region26: #{tpu_custom_call.1} parent=23 // pred_check_branch
          %147 = sbr.rel (%p145) target = $region28
        $region27: #{tpu_custom_call.1} parent=23 // pred_region
          %s148 = sand.u32 %s26, 1
          %s149 = scalar_lea.sflag [#allocation3], %s148
          %s150 = sand.u32 %s26, 1
          %s151 = smul.addr %s150, 256
          %s152 = scalar_lea.vmem [#allocation2], %s151
          %s153 = smul.u32 32, %s16
          %s155 = ssub.s32 4096, 4096
          %156 = vsyncadd %s149, %s155
          %s157 = smul.addr %s153, 128
          %s158 = scalar_lea.hbm %s0, %s157
          %s159 = sshll.u32 %s152, 4
          %s160 = int_to_ptr.vmem [resolvable:$true] %s159
          %165 = dma.hbm_to_vmem [thread:$0]  %s158, 4096, %s160, %s149, 128, 128, 8
        $region28: #{tpu_custom_call.1} parent=23 // pred_fallthru
          _
      $region24: #{tpu_custom_call.1} parent=5 // pred_fallthru
        _
      %p166 = scmp.le.s32.totalorder 1, %s16
      %p167 = scmp.lt.s32.totalorder %s16, 3
      %p168 = pnand %p166, %p167
      %p169 = pneg %p168
      // Predicated region
      $region29: #{tpu_custom_call.1} parent=5 // pred_check
        _
      $region30: #{tpu_custom_call.1} parent=5 // pred_check_branch
        %171 = sbr.rel (%p168) target = $region32
      $region31: #{tpu_custom_call.1} parent=5 // pred_region
        %s172 = ssub.s32 %s16, 1
        %s173 = sand.u32 %s29, 1
        %s174 = scalar_lea.sflag [#allocation3], %s173
        %s175 = sand.u32 %s29, 1
        %s176 = smul.addr %s175, 256
        %s177 = scalar_lea.vmem [#allocation2], %s176
        // Predicated region
        $region33: #{tpu_custom_call.1} parent=31 // pred_check
          %p178 = pneg %p42
        $region34: #{tpu_custom_call.1} parent=31 // pred_check_branch
          %180 = sbr.rel (%p178) target = $region36
        $region35: #{tpu_custom_call.1} parent=31 // pred_region
          %181 = dma.done %s174, 4096
        $region36: #{tpu_custom_call.1} parent=31 // pred_fallthru
          _
        // Predicated region
        $region37: #{tpu_custom_call.1} parent=31 // pred_check
          %p182 = pneg %p63
        $region38: #{tpu_custom_call.1} parent=31 // pred_check_branch
          %184 = sbr.rel (%p182) target = $region40
        $region39: #{tpu_custom_call.1} parent=31 // pred_region
          %185 = dma.done [#allocation6], 2048
        $region40: #{tpu_custom_call.1} parent=31 // pred_fallthru
          _
        %s186 = sand.u32 %s29, 1
        %s187 = scalar_lea.sflag [#allocation3], %s186
        %s188 = sand.u32 %s29, 1
        %s189 = smul.addr %s188, 256
        %s190 = scalar_lea.vmem [#allocation2], %s189
        %p191 = pneg %p42
        %p192 = pneg %p39
        %p193 = pneg %p63
        %p194 = pneg %p60
        %p195 = pneg %p84
        %p196 = pneg %p81
        %p197 = pneg %p110
        %p198 = pneg %p107
        %s199 = sand.u32 %s97, 1
        %s200 = scalar_lea.sflag [#allocation4], %s199
        %s201 = sand.u32 %s97, 1
        %s202 = smul.addr %s201, 256
        %s203 = scalar_lea.vmem [#allocation7], %s202
        %s204 = smul.u32 32, %s21
        %s205 = smul.u32 32, %s21
        %v206 = vld [vmem:[%s177] sm:$0xff]
        %v207 = vld [vmem:[%s177 + $0x8] sm:$0xff]
        %v208 = vld [vmem:[%s177 + $0x10] sm:$0xff]
        %v209 = vld [vmem:[%s177 + $0x18] sm:$0xff]
        %v210 = vld [vmem:[%s177 + $0x20] sm:$0xff]
        %v211 = vld [vmem:[%s177 + $0x28] sm:$0xff]
        %v212 = vld [vmem:[%s177 + $0x30] sm:$0xff]
        %v213 = vld [vmem:[%s177 + $0x38] sm:$0xff]
        %v214 = vld [vmem:[%s177 + $0x40] sm:$0xff]
        %v215 = vld [vmem:[%s177 + $0x48] sm:$0xff]
        %v216 = vld [vmem:[%s177 + $0x50] sm:$0xff]
        %v217 = vld [vmem:[%s177 + $0x58] sm:$0xff]
        %v218 = vld [vmem:[%s177 + $0x60] sm:$0xff]
        %v219 = vld [vmem:[%s177 + $0x68] sm:$0xff]
        %v220 = vld [vmem:[%s177 + $0x70] sm:$0xff]
        %v221 = vld [vmem:[%s177 + $0x78] sm:$0xff]
        %v222 = vld [vmem:[%s177 + $0x80] sm:$0xff]
        %v223 = vld [vmem:[%s177 + $0x88] sm:$0xff]
        %v224 = vld [vmem:[%s177 + $0x90] sm:$0xff]
        %v225 = vld [vmem:[%s177 + $0x98] sm:$0xff]
        %v226 = vld [vmem:[%s177 + $0xa0] sm:$0xff]
        %v227 = vld [vmem:[%s177 + $0xa8] sm:$0xff]
        %v228 = vld [vmem:[%s177 + $0xb0] sm:$0xff]
        %v229 = vld [vmem:[%s177 + $0xb8] sm:$0xff]
        %v230 = vld [vmem:[%s177 + $0xc0] sm:$0xff]
        %v231 = vld [vmem:[%s177 + $0xc8] sm:$0xff]
        %v232 = vld [vmem:[%s177 + $0xd0] sm:$0xff]
        %v233 = vld [vmem:[%s177 + $0xd8] sm:$0xff]
        %v234 = vld [vmem:[%s177 + $0xe0] sm:$0xff]
        %v235 = vld [vmem:[%s177 + $0xe8] sm:$0xff]
        %v236 = vld [vmem:[%s177 + $0xf0] sm:$0xff]
        %v237 = vld [vmem:[%s177 + $0xf8] sm:$0xff]
        %v238 = vld [vmem:[#allocation5] sm:$0xff]
        %v239 = vld [vmem:[#allocation5 + $0x8] sm:$0xff]
        %v240 = vld [vmem:[#allocation5 + $0x10] sm:$0xff]
        %v241 = vld [vmem:[#allocation5 + $0x18] sm:$0xff]
        %v242 = vld [vmem:[#allocation5 + $0x20] sm:$0xff]
        %v243 = vld [vmem:[#allocation5 + $0x28] sm:$0xff]
        %v244 = vld [vmem:[#allocation5 + $0x30] sm:$0xff]
        %v245 = vld [vmem:[#allocation5 + $0x38] sm:$0xff]
        %v246 = vld [vmem:[#allocation5 + $0x40] sm:$0xff]
        %v247 = vld [vmem:[#allocation5 + $0x48] sm:$0xff]
        %v248 = vld [vmem:[#allocation5 + $0x50] sm:$0xff]
        %v249 = vld [vmem:[#allocation5 + $0x58] sm:$0xff]
        %v250 = vld [vmem:[#allocation5 + $0x60] sm:$0xff]
        %v251 = vld [vmem:[#allocation5 + $0x68] sm:$0xff]
        %v252 = vld [vmem:[#allocation5 + $0x70] sm:$0xff]
        %v253 = vld [vmem:[#allocation5 + $0x78] sm:$0xff]
        %v254 = vld [vmem:[%s2] sm:$0x1]
        %v256 = vlaneseq
        %v257 = vshrl.u32 %v256, 7
        %v258 = vsub.s32 0, %v257
        %v259 = vrot.slane %v254, %v258
        %261 = vmatprep.subr.mxu0 0.0
        %262 = vmatpush1.msra.mxu0 %v253
        %263 = vmatprep.subr.mxu0 0.0
        %264 = vmatpush1.msra.mxu0 %v252
        %265 = vmatprep.subr.mxu0 0.0
        %266 = vmatpush1.msra.mxu0 %v251
        %267 = vmatprep.subr.mxu0 0.0
        %268 = vmatpush1.msra.mxu0 %v250
        %269 = vmatprep.subr.mxu0 0.0
        %270 = vmatpush1.msra.mxu0 %v249
        %271 = vmatprep.subr.mxu0 0.0
        %272 = vmatpush1.msra.mxu0 %v248
        %273 = vmatprep.subr.mxu0 0.0
        %274 = vmatpush1.msra.mxu0 %v247
        %275 = vmatprep.subr.mxu0 0.0
        %276 = vmatpush1.msra.mxu0 %v246
        %277 = vmatprep.subr.mxu0 0.0
        %278 = vmatpush1.msra.mxu0 %v245
        %279 = vmatprep.subr.mxu0 0.0
        %280 = vmatpush1.msra.mxu0 %v244
        %281 = vmatprep.subr.mxu0 0.0
        %282 = vmatpush1.msra.mxu0 %v243
        %283 = vmatprep.subr.mxu0 0.0
        %284 = vmatpush1.msra.mxu0 %v242
        %285 = vmatprep.subr.mxu0 0.0
        %286 = vmatpush1.msra.mxu0 %v241
        %287 = vmatprep.subr.mxu0 0.0
        %288 = vmatpush1.msra.mxu0 %v240
        %289 = vmatprep.subr.mxu0 0.0
        %290 = vmatpush1.msra.mxu0 %v239
        %291 = vmatprep.subr.mxu0 0.0
        %292 = vmatpush1.msra.mxu0 %v238
        %293 = vmatprep.subr.mxu0 0.0
        %294 = vmatpush2.msra.mxu0 0.0
        %295 = vmatprep.subr.mxu0 0.0
        %296 = vmatpush2.msra.mxu0 0.0
        %297 = vmatprep.subr.mxu0 0.0
        %298 = vmatpush2.msra.mxu0 0.0
        %299 = vmatprep.subr.mxu0 0.0
        %300 = vmatpush2.msra.mxu0 0.0
        %301 = vmatprep.subr.mxu0 0.0
        %302 = vmatpush2.msra.mxu0 0.0
        %303 = vmatprep.subr.mxu0 0.0
        %304 = vmatpush2.msra.mxu0 0.0
        %305 = vmatprep.subr.mxu0 0.0
        %306 = vmatpush2.msra.mxu0 0.0
        %307 = vmatprep.subr.mxu0 0.0
        %308 = vmatpush2.msra.mxu0 0.0
        %309 = vmatprep.subr.mxu0 0.0
        %310 = vmatpush2.msra.mxu0 0.0
        %311 = vmatprep.subr.mxu0 0.0
        %312 = vmatpush2.msra.mxu0 0.0
        %313 = vmatprep.subr.mxu0 0.0
        %314 = vmatpush2.msra.mxu0 0.0
        %315 = vmatprep.subr.mxu0 0.0
        %316 = vmatpush2.msra.mxu0 0.0
        %317 = vmatprep.subr.mxu0 0.0
        %318 = vmatpush2.msra.mxu0 0.0
        %319 = vmatprep.subr.mxu0 0.0
        %320 = vmatpush2.msra.mxu0 0.0
        %321 = vmatprep.subr.mxu0 0.0
        %322 = vmatpush2.msra.mxu0 0.0
        %323 = vmatprep.subr.mxu0 0.0
        %324 = vmatpush2.msra.mxu0 0.0
        %325 = vmatprep.mubr.f32.mxu0 0.0
        %326 = vmatmul.mubr.f32.gmra.mxu0 %v206
        %v327 = vpop.f32.mrf.mxu0
        %v328 = vadd.f32 %v259, %v327
        %v329 = vpop.f32.mrf.mxu0
        %330 = vmatprep.mubr.f32.mxu0 0.0
        %331 = vmatmul.mubr.f32.gmra.mxu0 %v207
        %v332 = vpop.f32.mrf.mxu0
        %v333 = vadd.f32 %v259, %v332
        %v334 = vpop.f32.mrf.mxu0
        %335 = vmatprep.mubr.f32.mxu0 0.0
        %336 = vmatmul.mubr.f32.gmra.mxu0 %v208
        %v337 = vpop.f32.mrf.mxu0
        %v338 = vadd.f32 %v259, %v337
        %v339 = vpop.f32.mrf.mxu0
        %340 = vmatprep.mubr.f32.mxu0 0.0
        %341 = vmatmul.mubr.f32.gmra.mxu0 %v209
        %v342 = vpop.f32.mrf.mxu0
        %v343 = vadd.f32 %v259, %v342
        %v344 = vpop.f32.mrf.mxu0
        %345 = vmatprep.mubr.f32.mxu0 0.0
        %346 = vmatmul.mubr.f32.gmra.mxu0 %v210
        %v347 = vpop.f32.mrf.mxu0
        %v348 = vadd.f32 %v259, %v347
        %v349 = vpop.f32.mrf.mxu0
        %350 = vmatprep.mubr.f32.mxu0 0.0
        %351 = vmatmul.mubr.f32.gmra.mxu0 %v211
        %v352 = vpop.f32.mrf.mxu0
        %v353 = vadd.f32 %v259, %v352
        %v354 = vpop.f32.mrf.mxu0
        %355 = vmatprep.mubr.f32.mxu0 0.0
        %356 = vmatmul.mubr.f32.gmra.mxu0 %v212
        %v357 = vpop.f32.mrf.mxu0
        %v358 = vadd.f32 %v259, %v357
        %v359 = vpop.f32.mrf.mxu0
        %360 = vmatprep.mubr.f32.mxu0 0.0
        %361 = vmatmul.mubr.f32.gmra.mxu0 %v213
        %v362 = vpop.f32.mrf.mxu0
        %v363 = vadd.f32 %v259, %v362
        %v364 = vpop.f32.mrf.mxu0
        %365 = vmatprep.mubr.f32.mxu0 0.0
        %366 = vmatmul.mubr.f32.gmra.mxu0 %v214
        %v367 = vpop.f32.mrf.mxu0
        %v368 = vadd.f32 %v259, %v367
        %v369 = vpop.f32.mrf.mxu0
        %370 = vmatprep.mubr.f32.mxu0 0.0
        %371 = vmatmul.mubr.f32.gmra.mxu0 %v215
        %v372 = vpop.f32.mrf.mxu0
        %v373 = vadd.f32 %v259, %v372
        %v374 = vpop.f32.mrf.mxu0
        %375 = vmatprep.mubr.f32.mxu0 0.0
        %376 = vmatmul.mubr.f32.gmra.mxu0 %v216
        %v377 = vpop.f32.mrf.mxu0
        %v378 = vadd.f32 %v259, %v377
        %v379 = vpop.f32.mrf.mxu0
        %380 = vmatprep.mubr.f32.mxu0 0.0
        %381 = vmatmul.mubr.f32.gmra.mxu0 %v217
        %v382 = vpop.f32.mrf.mxu0
        %v383 = vadd.f32 %v259, %v382
        %v384 = vpop.f32.mrf.mxu0
        %385 = vmatprep.mubr.f32.mxu0 0.0
        %386 = vmatmul.mubr.f32.gmra.mxu0 %v218
        %v387 = vpop.f32.mrf.mxu0
        %v388 = vadd.f32 %v259, %v387
        %v389 = vpop.f32.mrf.mxu0
        %390 = vmatprep.mubr.f32.mxu0 0.0
        %391 = vmatmul.mubr.f32.gmra.mxu0 %v219
        %v392 = vpop.f32.mrf.mxu0
        %v393 = vadd.f32 %v259, %v392
        %v394 = vpop.f32.mrf.mxu0
        %395 = vmatprep.mubr.f32.mxu0 0.0
        %396 = vmatmul.mubr.f32.gmra.mxu0 %v220
        %v397 = vpop.f32.mrf.mxu0
        %v398 = vadd.f32 %v259, %v397
        %v399 = vpop.f32.mrf.mxu0
        %400 = vmatprep.mubr.f32.mxu0 0.0
        %401 = vmatmul.mubr.f32.gmra.mxu0 %v221
        %v402 = vpop.f32.mrf.mxu0
        %v403 = vadd.f32 %v259, %v402
        %v404 = vpop.f32.mrf.mxu0
        %405 = vmatprep.mubr.f32.mxu0 0.0
        %406 = vmatmul.mubr.f32.gmra.mxu0 %v222
        %v407 = vpop.f32.mrf.mxu0
        %v408 = vadd.f32 %v259, %v407
        %v409 = vpop.f32.mrf.mxu0
        %410 = vmatprep.mubr.f32.mxu0 0.0
        %411 = vmatmul.mubr.f32.gmra.mxu0 %v223
        %v412 = vpop.f32.mrf.mxu0
        %v413 = vadd.f32 %v259, %v412
        %v414 = vpop.f32.mrf.mxu0
        %415 = vmatprep.mubr.f32.mxu0 0.0
        %416 = vmatmul.mubr.f32.gmra.mxu0 %v224
        %v417 = vpop.f32.mrf.mxu0
        %v418 = vadd.f32 %v259, %v417
        %v419 = vpop.f32.mrf.mxu0
        %420 = vmatprep.mubr.f32.mxu0 0.0
        %421 = vmatmul.mubr.f32.gmra.mxu0 %v225
        %v422 = vpop.f32.mrf.mxu0
        %v423 = vadd.f32 %v259, %v422
        %v424 = vpop.f32.mrf.mxu0
        %425 = vmatprep.mubr.f32.mxu0 0.0
        %426 = vmatmul.mubr.f32.gmra.mxu0 %v226
        %v427 = vpop.f32.mrf.mxu0
        %v428 = vadd.f32 %v259, %v427
        %v429 = vpop.f32.mrf.mxu0
        %430 = vmatprep.mubr.f32.mxu0 0.0
        %431 = vmatmul.mubr.f32.gmra.mxu0 %v227
        %v432 = vpop.f32.mrf.mxu0
        %v433 = vadd.f32 %v259, %v432
        %v434 = vpop.f32.mrf.mxu0
        %435 = vmatprep.mubr.f32.mxu0 0.0
        %436 = vmatmul.mubr.f32.gmra.mxu0 %v228
        %v437 = vpop.f32.mrf.mxu0
        %v438 = vadd.f32 %v259, %v437
        %v439 = vpop.f32.mrf.mxu0
        %440 = vmatprep.mubr.f32.mxu0 0.0
        %441 = vmatmul.mubr.f32.gmra.mxu0 %v229
        %v442 = vpop.f32.mrf.mxu0
        %v443 = vadd.f32 %v259, %v442
        %v444 = vpop.f32.mrf.mxu0
        %445 = vmatprep.mubr.f32.mxu0 0.0
        %446 = vmatmul.mubr.f32.gmra.mxu0 %v230
        %v447 = vpop.f32.mrf.mxu0
        %v448 = vadd.f32 %v259, %v447
        %v449 = vpop.f32.mrf.mxu0
        %450 = vmatprep.mubr.f32.mxu0 0.0
        %451 = vmatmul.mubr.f32.gmra.mxu0 %v231
        %v452 = vpop.f32.mrf.mxu0
        %v453 = vadd.f32 %v259, %v452
        %v454 = vpop.f32.mrf.mxu0
        %455 = vmatprep.mubr.f32.mxu0 0.0
        %456 = vmatmul.mubr.f32.gmra.mxu0 %v232
        %v457 = vpop.f32.mrf.mxu0
        %v458 = vadd.f32 %v259, %v457
        %v459 = vpop.f32.mrf.mxu0
        %460 = vmatprep.mubr.f32.mxu0 0.0
        %461 = vmatmul.mubr.f32.gmra.mxu0 %v233
        %v462 = vpop.f32.mrf.mxu0
        %v463 = vadd.f32 %v259, %v462
        %v464 = vpop.f32.mrf.mxu0
        %465 = vmatprep.mubr.f32.mxu0 0.0
        %466 = vmatmul.mubr.f32.gmra.mxu0 %v234
        %v467 = vpop.f32.mrf.mxu0
        %v468 = vadd.f32 %v259, %v467
        %v469 = vpop.f32.mrf.mxu0
        %470 = vmatprep.mubr.f32.mxu0 0.0
        %471 = vmatmul.mubr.f32.gmra.mxu0 %v235
        %v472 = vpop.f32.mrf.mxu0
        %v473 = vadd.f32 %v259, %v472
        %v474 = vpop.f32.mrf.mxu0
        %475 = vmatprep.mubr.f32.mxu0 0.0
        %476 = vmatmul.mubr.f32.gmra.mxu0 %v236
        %v477 = vpop.f32.mrf.mxu0
        %v478 = vadd.f32 %v259, %v477
        %v479 = vpop.f32.mrf.mxu0
        %480 = vmatprep.mubr.f32.mxu0 0.0
        %481 = vmatmul.mubr.f32.gmra.mxu0 %v237
        %v482 = vpop.f32.mrf.mxu0
        %v483 = vadd.f32 %v259, %v482
        %v484 = vpop.f32.mrf.mxu0
        %485 = vdwg.mxu0
        %486 = vst [vmem:[%s203] sm:$0xff] %v328
        %487 = vst [vmem:[%s203 + $0x8] sm:$0xff] %v333
        %488 = vst [vmem:[%s203 + $0x10] sm:$0xff] %v338
        %489 = vst [vmem:[%s203 + $0x18] sm:$0xff] %v343
        %490 = vst [vmem:[%s203 + $0x20] sm:$0xff] %v348
        %491 = vst [vmem:[%s203 + $0x28] sm:$0xff] %v353
        %492 = vst [vmem:[%s203 + $0x30] sm:$0xff] %v358
        %493 = vst [vmem:[%s203 + $0x38] sm:$0xff] %v363
        %494 = vst [vmem:[%s203 + $0x40] sm:$0xff] %v368
        %495 = vst [vmem:[%s203 + $0x48] sm:$0xff] %v373
        %496 = vst [vmem:[%s203 + $0x50] sm:$0xff] %v378
        %497 = vst [vmem:[%s203 + $0x58] sm:$0xff] %v383
        %498 = vst [vmem:[%s203 + $0x60] sm:$0xff] %v388
        %499 = vst [vmem:[%s203 + $0x68] sm:$0xff] %v393
        %500 = vst [vmem:[%s203 + $0x70] sm:$0xff] %v398
        %501 = vst [vmem:[%s203 + $0x78] sm:$0xff] %v403
        %502 = vst [vmem:[%s203 + $0x80] sm:$0xff] %v408
        %503 = vst [vmem:[%s203 + $0x88] sm:$0xff] %v413
        %504 = vst [vmem:[%s203 + $0x90] sm:$0xff] %v418
        %505 = vst [vmem:[%s203 + $0x98] sm:$0xff] %v423
        %506 = vst [vmem:[%s203 + $0xa0] sm:$0xff] %v428
        %507 = vst [vmem:[%s203 + $0xa8] sm:$0xff] %v433
        %508 = vst [vmem:[%s203 + $0xb0] sm:$0xff] %v438
        %509 = vst [vmem:[%s203 + $0xb8] sm:$0xff] %v443
        %510 = vst [vmem:[%s203 + $0xc0] sm:$0xff] %v448
        %511 = vst [vmem:[%s203 + $0xc8] sm:$0xff] %v453
        %512 = vst [vmem:[%s203 + $0xd0] sm:$0xff] %v458
        %513 = vst [vmem:[%s203 + $0xd8] sm:$0xff] %v463
        %514 = vst [vmem:[%s203 + $0xe0] sm:$0xff] %v468
        %515 = vst [vmem:[%s203 + $0xe8] sm:$0xff] %v473
        %516 = vst [vmem:[%s203 + $0xf0] sm:$0xff] %v478
        %517 = vst [vmem:[%s203 + $0xf8] sm:$0xff] %v483
        %s518 = sand.u32 %s97, 1
        %s519 = scalar_lea.sflag [#allocation4], %s518
        %s520 = sand.u32 %s97, 1
        %s521 = smul.addr %s520, 256
        %s522 = scalar_lea.vmem [#allocation7], %s521
        // Predicated region
        $region41: #{tpu_custom_call.1} parent=31 // pred_check
          %p523 = pneg %p107
        $region42: #{tpu_custom_call.1} parent=31 // pred_check_branch
          %525 = sbr.rel (%p523) target = $region44
        $region43: #{tpu_custom_call.1} parent=31 // pred_region
          %s526 = smul.u32 32, %s21
          %s528 = ssub.s32 4096, 4096
          %529 = vsyncadd %s519, %s528
          %s530 = smul.addr %s526, 128
          %s531 = scalar_lea.hbm %s3, %s530
          %s532 = sshll.u32 %s522, 4
          %s533 = int_to_ptr.vmem [resolvable:$true] %s532
          %538 = dma.vmem_to_hbm [thread:$0]  %s533, 4096, %s531, %s519, 128, 128, 8
        $region44: #{tpu_custom_call.1} parent=31 // pred_fallthru
          _
      $region32: #{tpu_custom_call.1} parent=5 // pred_fallthru
        _
      %p539 = scmp.le.s32.totalorder 2, %s16
      // Predicated region
      $region45: #{tpu_custom_call.1} parent=5 // pred_check
        %p540 = pneg %p539
      $region46: #{tpu_custom_call.1} parent=5 // pred_check_branch
        %542 = sbr.rel (%p540) target = $region48
      $region47: #{tpu_custom_call.1} parent=5 // pred_region
        %s543 = ssub.s32 %s16, 2
        // Predicated region
        $region49: #{tpu_custom_call.1} parent=47 // pred_check
          %p544 = pneg %p113
        $region50: #{tpu_custom_call.1} parent=47 // pred_check_branch
          %546 = sbr.rel (%p544) target = $region52
        $region51: #{tpu_custom_call.1} parent=47 // pred_region
          %s547 = sand.u32 %s98, 1
          %s548 = scalar_lea.sflag [#allocation4], %s547
          %s549 = sand.u32 %s98, 1
          %s550 = smul.addr %s549, 256
          %s551 = scalar_lea.vmem [#allocation7], %s550
          %552 = dma.done %s548, 4096
        $region52: #{tpu_custom_call.1} parent=47 // pred_fallthru
          _
      $region48: #{tpu_custom_call.1} parent=5 // pred_fallthru
        _
    $region6: #{tpu_custom_call.1} parent=1 // loop_footer
      %s20 = sadd.s32 1, %s16
    $region7: #{tpu_custom_call.1} parent=1 // loop_footer_branch
      %15 = sbr.rel target = $region3
    $region8: #{tpu_custom_call.1} parent=1 // loop_exit
      _
    %553 = vsyncpa [#allocation3], 1
    %s554 = scalar_lea.sflag [#allocation3], 1
    %555 = vsyncpa %s554, 1
    %556 = vsyncpa [#allocation6], 1
    %557 = vsyncpa [#allocation4], 1
    %s558 = scalar_lea.sflag [#allocation4], 1
    %559 = vsyncpa %s558, 1

// kernel: tpu_custom_call.1
$region0: #{tpu_custom_call.1}
  #allocation0 [shape = 'u32[]', space=smem, size = 0x4, offset = 0x4, fixed_abs, tag = 'smem constant byte address 0x4 - core index']
  #allocation1 [shape = 'u32[144,128]{1,0:T(1,128)}', space=vmem, size = 0x12000, scoped, tag = 'internal scratch']
  %s0 = inlined_call_operand.hbm [shape: f32[512,128], index: 0, kind: input, shape index: {}]
  %s1 = inlined_call_operand.hbm [shape: f32[128,128], index: 1, kind: input, shape index: {}]
  %s2 = inlined_call_operand.vmem [shape: f32[1,128], index: 2, kind: input, shape index: {}]
  %s3 = inlined_call_operand.hbm [shape: f32[512,128], index: 3, kind: output, shape index: {}]
  %s4 = sld [smem:[#allocation0]]
  $region53: #{tpu_custom_call.1} parent=0
    _
  %s6 = ssub.s32 1, %s4
  %s7 = scalar_select 0, %s6, %s4
  $region1: #{tpu_custom_call.1} parent=0
    #allocation2 [shape = 'u8[262144]{0}', space=vmem, size = 0x40000, scoped, tag = 'input window, operand 0']
    #allocation3 [shape = 's32[2]{0}', space=sflag, size = 0x8, scoped, tag = 'scoped memory for tpu_custom_call.1']
    #allocation4 [shape = 's32[2]{0}', space=sflag, size = 0x8, scoped, tag = 'scoped memory for tpu_custom_call.1']
    #allocation5 [shape = 'u8[65536]{0}', space=vmem, size = 0x10000, scoped, tag = 'input window, operand 1, single buffered']
    #allocation6 [shape = 's32[1]{0}', space=sflag, size = 0x4, scoped, tag = 'scoped memory for tpu_custom_call.1']
    #allocation7 [shape = 'u8[262144]{0}', space=vmem, size = 0x40000, scoped, tag = 'output window, operand 0']
    %8 = vsyncpa [#allocation3], 0
    %s9 = scalar_lea.sflag [#allocation3], 1
    %10 = vsyncpa %s9, 0
    %11 = vsyncpa [#allocation6], 0
    %12 = vsyncpa [#allocation4], 0
    %s13 = scalar_lea.sflag [#allocation4], 1
    %14 = vsyncpa %s13, 0
    loop: start=0, step=1, limit=4
    $region2: #{tpu_custom_call.1} parent=1 // loop_pre_header
      _
    $region3: #{tpu_custom_call.1} parent=1 // loop_header
      %s16 = sphi 0, %s20
      %p17 = scmp.ge.s32.totalorder %s16, 4
      %s26 = sphi 0, %s28
      %s29 = sphi 0, %s26
      %s30 = sphi 0, %s29
      %s46 = sphi 0, %s30
      %s50 = sphi 0, %s50
      %s52 = sphi 0, %s50
      %s53 = sphi 0, %s52
      %s67 = sphi 0, %s53
      %s71 = sphi 0, %s71
      %s73 = sphi 0, %s71
      %s74 = sphi 0, %s73
      %s88 = sphi 0, %s74
      %s94 = sphi 0, %s96
      %s97 = sphi 0, %s94
      %s98 = sphi 0, %s97
      %s114 = sphi 0, %s98
    $region4: #{tpu_custom_call.1} parent=1 // loop_header_branch
      %19 = sbr.rel (%p17) target = $region8
    $region5: #{tpu_custom_call.1} parent=1 // loop_body
      %s21 = ssub.s32 %s16, 1
      %s22 = ssub.s32 %s16, 2
      %s23 = sadd.s32 %s16, 1
      %s24 = ssub.s32 %s16, %s23
      %p25 = scmp.eq.s32.totalorder %s24, 0
      %s27 = sadd.s32 %s26, 1
      %s28 = scalar_select %p25, %s26, %s27
      %p31 = pneg %p25
      %p32 = scmp.eq.s32.totalorder %s16, 1
      %p33 = por %p31, %p32
      %p34 = scmp.ne.s32.totalorder %s26, %s29
      %p35 = scmp.eq.s32.totalorder %s16, 0
      %p36 = por %p34, %p35
      %p37 = scmp.ne.s32.totalorder %s26, %s29
      %p38 = scmp.eq.s32.totalorder %s21, 1
      %p39 = por %p37, %p38
      %p40 = scmp.ne.s32.totalorder %s29, %s30
      %p41 = scmp.eq.s32.totalorder %s21, 0
      %p42 = por %p40, %p41
      %p43 = scmp.ne.s32.totalorder %s29, %s30
      %p44 = scmp.eq.s32.totalorder %s22, 1
      %p45 = por %p43, %p44
      %p47 = scmp.ne.s32.totalorder %s30, %s46
      %p48 = scmp.eq.s32.totalorder %s22, 0
      %p49 = por %p47, %p48
      %s51 = sadd.s32 %s50, 1
      %p54 = scmp.eq.s32.totalorder %s16, 1
      %p55 = scmp.ne.s32.totalorder %s50, %s52
      %p56 = scmp.eq.s32.totalorder %s16, 0
      %p57 = por %p55, %p56
      %p58 = scmp.ne.s32.totalorder %s50, %s52
      %p59 = scmp.eq.s32.totalorder %s21, 1
      %p60 = por %p58, %p59
      %p61 = scmp.ne.s32.totalorder %s52, %s53
      %p62 = scmp.eq.s32.totalorder %s21, 0
      %p63 = por %p61, %p62
      %p64 = scmp.ne.s32.totalorder %s52, %s53
      %p65 = scmp.eq.s32.totalorder %s22, 1
      %p66 = por %p64, %p65
      %p68 = scmp.ne.s32.totalorder %s53, %s67
      %p69 = scmp.eq.s32.totalorder %s22, 0
      %p70 = por %p68, %p69
      %s72 = sadd.s32 %s71, 1
      %p75 = scmp.eq.s32.totalorder %s16, 1
      %p76 = scmp.ne.s32.totalorder %s71, %s73
      %p77 = scmp.eq.s32.totalorder %s16, 0
      %p78 = por %p76, %p77
      %p79 = scmp.ne.s32.totalorder %s71, %s73
      %p80 = scmp.eq.s32.totalorder %s21, 1
      %p81 = por %p79, %p80
      %p82 = scmp.ne.s32.totalorder %s73, %s74
      %p83 = scmp.eq.s32.totalorder %s21, 0
      %p84 = por %p82, %p83
      %p85 = scmp.ne.s32.totalorder %s73, %s74
      %p86 = scmp.eq.s32.totalorder %s22, 1
      %p87 = por %p85, %p86
      %p89 = scmp.ne.s32.totalorder %s74, %s88
      %p90 = scmp.eq.s32.totalorder %s22, 0
      %p91 = por %p89, %p90
      %s92 = ssub.s32 %s16, %s23
      %p93 = scmp.eq.s32.totalorder %s92, 0
      %s95 = sadd.s32 %s94, 1
      %s96 = scalar_select %p93, %s94, %s95
      %p99 = pneg %p93
      %p100 = scmp.eq.s32.totalorder %s16, 1
      %p101 = por %p99, %p100
      %p102 = scmp.ne.s32.totalorder %s94, %s97
      %p103 = scmp.eq.s32.totalorder %s16, 0
      %p104 = por %p102, %p103
      %p105 = scmp.ne.s32.totalorder %s94, %s97
      %p106 = scmp.eq.s32.totalorder %s21, 1
      %p107 = por %p105, %p106
      %p108 = scmp.ne.s32.totalorder %s97, %s98
      %p109 = scmp.eq.s32.totalorder %s21, 0
      %p110 = por %p108, %p109
      %p111 = scmp.ne.s32.totalorder %s97, %s98
      %p112 = scmp.eq.s32.totalorder %s22, 1
      %p113 = por %p111, %p112
      %p115 = scmp.ne.s32.totalorder %s98, %s114
      %p116 = scmp.eq.s32.totalorder %s22, 0
      %p117 = por %p115, %p116
      %p118 = scmp.le.s32.totalorder 1, %s16
      %p119 = scmp.lt.s32.totalorder %s16, 3
      %p120 = pnand %p118, %p119
      %p121 = pneg %p120
      // Predicated region
      $region9: #{tpu_custom_call.1} parent=5 // pred_check
        _
      $region10: #{tpu_custom_call.1} parent=5 // pred_check_branch
        %123 = sbr.rel (%p120) target = $region12
      $region11: #{tpu_custom_call.1} parent=5 // pred_region
        %s124 = ssub.s32 %s16, 1
        // Predicated region
        $region13: #{tpu_custom_call.1} parent=11 // pred_check
          %p125 = pneg %p63
        $region14: #{tpu_custom_call.1} parent=11 // pred_check_branch
          %127 = sbr.rel (%p125) target = $region16
        $region15: #{tpu_custom_call.1} parent=11 // pred_region
          %s129 = ssub.s32 2048, 2048
          %130 = vsyncadd [#allocation6], %s129
          %s131 = sshll.u32 [#allocation5], 4
          %s132 = int_to_ptr.vmem [resolvable:$true] %s131
          %137 = dma.hbm_to_vmem [thread:$0]  %s1, 2048, %s132, [#allocation6], 128, 128, 8
        $region16: #{tpu_custom_call.1} parent=11 // pred_fallthru
          _
        // Predicated region
        $region17: #{tpu_custom_call.1} parent=11 // pred_check
          %p138 = pneg %p84
        $region18: #{tpu_custom_call.1} parent=11 // pred_check_branch
          %140 = sbr.rel (%p138) target = $region20
        $region19: #{tpu_custom_call.1} parent=11 // pred_region
          _
        $region20: #{tpu_custom_call.1} parent=11 // pred_fallthru
          _
      $region12: #{tpu_custom_call.1} parent=5 // pred_fallthru
        _
      %p141 = scmp.lt.s32.totalorder %s16, 2
      // Predicated region
      $region21: #{tpu_custom_call.1} parent=5 // pred_check
        %p142 = pneg %p141
      $region22: #{tpu_custom_call.1} parent=5 // pred_check_branch
        %144 = sbr.rel (%p142) target = $region24
      $region23: #{tpu_custom_call.1} parent=5 // pred_region
        // Predicated region
        $region25: #{tpu_custom_call.1} parent=23 // pred_check
          %p145 = pneg %p36
        $region26: #{tpu_custom_call.1} parent=23 // pred_check_branch
          %147 = sbr.rel (%p145) target = $region28
        $region27: #{tpu_custom_call.1} parent=23 // pred_region
          %s148 = sand.u32 %s26, 1
          %s149 = scalar_lea.sflag [#allocation3], %s148
          %s150 = sand.u32 %s26, 1
          %s151 = smul.addr %s150, 256
          %s152 = scalar_lea.vmem [#allocation2], %s151
          %s153 = smul.u32 32, %s16
          %s155 = ssub.s32 4096, 4096
          %156 = vsyncadd %s149, %s155
          %s157 = smul.addr %s153, 128
          %s158 = scalar_lea.hbm %s0, %s157
          %s159 = sshll.u32 %s152, 4
          %s160 = int_to_ptr.vmem [resolvable:$true] %s159
          %165 = dma.hbm_to_vmem [thread:$0]  %s158, 4096, %s160, %s149, 128, 128, 8
        $region28: #{tpu_custom_call.1} parent=23 // pred_fallthru
          _
      $region24: #{tpu_custom_call.1} parent=5 // pred_fallthru
        _
      %p166 = scmp.le.s32.totalorder 1, %s16
      %p167 = scmp.lt.s32.totalorder %s16, 3
      %p168 = pnand %p166, %p167
      %p169 = pneg %p168
      // Predicated region
      $region29: #{tpu_custom_call.1} parent=5 // pred_check
        _
      $region30: #{tpu_custom_call.1} parent=5 // pred_check_branch
        %171 = sbr.rel (%p168) target = $region32
      $region31: #{tpu_custom_call.1} parent=5 // pred_region
        %s172 = ssub.s32 %s16, 1
        %s173 = sand.u32 %s29, 1
        %s174 = scalar_lea.sflag [#allocation3], %s173
        %s175 = sand.u32 %s29, 1
        %s176 = smul.addr %s175, 256
        %s177 = scalar_lea.vmem [#allocation2], %s176
        // Predicated region
        $region33: #{tpu_custom_call.1} parent=31 // pred_check
          %p178 = pneg %p42
        $region34: #{tpu_custom_call.1} parent=31 // pred_check_branch
          %180 = sbr.rel (%p178) target = $region36
        $region35: #{tpu_custom_call.1} parent=31 // pred_region
          %181 = dma.done %s174, 4096
        $region36: #{tpu_custom_call.1} parent=31 // pred_fallthru
          _
        // Predicated region
        $region37: #{tpu_custom_call.1} parent=31 // pred_check
          %p182 = pneg %p63
        $region38: #{tpu_custom_call.1} parent=31 // pred_check_branch
          %184 = sbr.rel (%p182) target = $region40
        $region39: #{tpu_custom_call.1} parent=31 // pred_region
          %185 = dma.done [#allocation6], 2048
        $region40: #{tpu_custom_call.1} parent=31 // pred_fallthru
          _
        %s186 = sand.u32 %s29, 1
        %s187 = scalar_lea.sflag [#allocation3], %s186
        %s188 = sand.u32 %s29, 1
        %s189 = smul.addr %s188, 256
        %s190 = scalar_lea.vmem [#allocation2], %s189
        %p191 = pneg %p42
        %p192 = pneg %p39
        %p193 = pneg %p63
        %p194 = pneg %p60
        %p195 = pneg %p84
        %p196 = pneg %p81
        %p197 = pneg %p110
        %p198 = pneg %p107
        %s199 = sand.u32 %s97, 1
        %s200 = scalar_lea.sflag [#allocation4], %s199
        %s201 = sand.u32 %s97, 1
        %s202 = smul.addr %s201, 256
        %s203 = scalar_lea.vmem [#allocation7], %s202
        %s204 = smul.u32 32, %s21
        %s205 = smul.u32 32, %s21
        %v206 = vld [vmem:[%s177] sm:$0xff]
        %v207 = vld [vmem:[%s177 + $0x8] sm:$0xff]
        %v208 = vld [vmem:[%s177 + $0x10] sm:$0xff]
        %v209 = vld [vmem:[%s177 + $0x18] sm:$0xff]
        %v210 = vld [vmem:[%s177 + $0x20] sm:$0xff]
        %v211 = vld [vmem:[%s177 + $0x28] sm:$0xff]
        %v212 = vld [vmem:[%s177 + $0x30] sm:$0xff]
        %v213 = vld [vmem:[%s177 + $0x38] sm:$0xff]
        %v214 = vld [vmem:[%s177 + $0x40] sm:$0xff]
        %v215 = vld [vmem:[%s177 + $0x48] sm:$0xff]
        %v216 = vld [vmem:[%s177 + $0x50] sm:$0xff]
        %v217 = vld [vmem:[%s177 + $0x58] sm:$0xff]
        %v218 = vld [vmem:[%s177 + $0x60] sm:$0xff]
        %v219 = vld [vmem:[%s177 + $0x68] sm:$0xff]
        %v220 = vld [vmem:[%s177 + $0x70] sm:$0xff]
        %v221 = vld [vmem:[%s177 + $0x78] sm:$0xff]
        %v222 = vld [vmem:[%s177 + $0x80] sm:$0xff]
        %v223 = vld [vmem:[%s177 + $0x88] sm:$0xff]
        %v224 = vld [vmem:[%s177 + $0x90] sm:$0xff]
        %v225 = vld [vmem:[%s177 + $0x98] sm:$0xff]
        %v226 = vld [vmem:[%s177 + $0xa0] sm:$0xff]
        %v227 = vld [vmem:[%s177 + $0xa8] sm:$0xff]
        %v228 = vld [vmem:[%s177 + $0xb0] sm:$0xff]
        %v229 = vld [vmem:[%s177 + $0xb8] sm:$0xff]
        %v230 = vld [vmem:[%s177 + $0xc0] sm:$0xff]
        %v231 = vld [vmem:[%s177 + $0xc8] sm:$0xff]
        %v232 = vld [vmem:[%s177 + $0xd0] sm:$0xff]
        %v233 = vld [vmem:[%s177 + $0xd8] sm:$0xff]
        %v234 = vld [vmem:[%s177 + $0xe0] sm:$0xff]
        %v235 = vld [vmem:[%s177 + $0xe8] sm:$0xff]
        %v236 = vld [vmem:[%s177 + $0xf0] sm:$0xff]
        %v237 = vld [vmem:[%s177 + $0xf8] sm:$0xff]
        %v238 = vld [vmem:[#allocation5] sm:$0xff]
        %v239 = vld [vmem:[#allocation5 + $0x8] sm:$0xff]
        %v240 = vld [vmem:[#allocation5 + $0x10] sm:$0xff]
        %v241 = vld [vmem:[#allocation5 + $0x18] sm:$0xff]
        %v242 = vld [vmem:[#allocation5 + $0x20] sm:$0xff]
        %v243 = vld [vmem:[#allocation5 + $0x28] sm:$0xff]
        %v244 = vld [vmem:[#allocation5 + $0x30] sm:$0xff]
        %v245 = vld [vmem:[#allocation5 + $0x38] sm:$0xff]
        %v246 = vld [vmem:[#allocation5 + $0x40] sm:$0xff]
        %v247 = vld [vmem:[#allocation5 + $0x48] sm:$0xff]
        %v248 = vld [vmem:[#allocation5 + $0x50] sm:$0xff]
        %v249 = vld [vmem:[#allocation5 + $0x58] sm:$0xff]
        %v250 = vld [vmem:[#allocation5 + $0x60] sm:$0xff]
        %v251 = vld [vmem:[#allocation5 + $0x68] sm:$0xff]
        %v252 = vld [vmem:[#allocation5 + $0x70] sm:$0xff]
        %v253 = vld [vmem:[#allocation5 + $0x78] sm:$0xff]
        %v254 = vld [vmem:[%s2] sm:$0x1]
        %v256 = vlaneseq
        %v257 = vshrl.u32 %v256, 7
        %v258 = vsub.s32 0, %v257
        %v259 = vrot.slane %v254, %v258
        %261 = vmatprep.subr.mxu0 0.0
        %262 = vmatpush1.msra.mxu0 %v253
        %263 = vmatprep.subr.mxu0 0.0
        %264 = vmatpush1.msra.mxu0 %v252
        %265 = vmatprep.subr.mxu0 0.0
        %266 = vmatpush1.msra.mxu0 %v251
        %267 = vmatprep.subr.mxu0 0.0
        %268 = vmatpush1.msra.mxu0 %v250
        %269 = vmatprep.subr.mxu0 0.0
        %270 = vmatpush1.msra.mxu0 %v249
        %271 = vmatprep.subr.mxu0 0.0
        %272 = vmatpush1.msra.mxu0 %v248
        %273 = vmatprep.subr.mxu0 0.0
        %274 = vmatpush1.msra.mxu0 %v247
        %275 = vmatprep.subr.mxu0 0.0
        %276 = vmatpush1.msra.mxu0 %v246
        %277 = vmatprep.subr.mxu0 0.0
        %278 = vmatpush1.msra.mxu0 %v245
        %279 = vmatprep.subr.mxu0 0.0
        %280 = vmatpush1.msra.mxu0 %v244
        %281 = vmatprep.subr.mxu0 0.0
        %282 = vmatpush1.msra.mxu0 %v243
        %283 = vmatprep.subr.mxu0 0.0
        %284 = vmatpush1.msra.mxu0 %v242
        %285 = vmatprep.subr.mxu0 0.0
        %286 = vmatpush1.msra.mxu0 %v241
        %287 = vmatprep.subr.mxu0 0.0
        %288 = vmatpush1.msra.mxu0 %v240
        %289 = vmatprep.subr.mxu0 0.0
        %290 = vmatpush1.msra.mxu0 %v239
        %291 = vmatprep.subr.mxu0 0.0
        %292 = vmatpush1.msra.mxu0 %v238
        %293 = vmatprep.subr.mxu0 0.0
        %294 = vmatpush2.msra.mxu0 0.0
        %295 = vmatprep.subr.mxu0 0.0
        %296 = vmatpush2.msra.mxu0 0.0
        %297 = vmatprep.subr.mxu0 0.0
        %298 = vmatpush2.msra.mxu0 0.0
        %299 = vmatprep.subr.mxu0 0.0
        %300 = vmatpush2.msra.mxu0 0.0
        %301 = vmatprep.subr.mxu0 0.0
        %302 = vmatpush2.msra.mxu0 0.0
        %303 = vmatprep.subr.mxu0 0.0
        %304 = vmatpush2.msra.mxu0 0.0
        %305 = vmatprep.subr.mxu0 0.0
        %306 = vmatpush2.msra.mxu0 0.0
        %307 = vmatprep.subr.mxu0 0.0
        %308 = vmatpush2.msra.mxu0 0.0
        %309 = vmatprep.subr.mxu0 0.0
        %310 = vmatpush2.msra.mxu0 0.0
        %311 = vmatprep.subr.mxu0 0.0
        %312 = vmatpush2.msra.mxu0 0.0
        %313 = vmatprep.subr.mxu0 0.0
        %314 = vmatpush2.msra.mxu0 0.0
        %315 = vmatprep.subr.mxu0 0.0
        %316 = vmatpush2.msra.mxu0 0.0
        %317 = vmatprep.subr.mxu0 0.0
        %318 = vmatpush2.msra.mxu0 0.0
        %319 = vmatprep.subr.mxu0 0.0
        %320 = vmatpush2.msra.mxu0 0.0
        %321 = vmatprep.subr.mxu0 0.0
        %322 = vmatpush2.msra.mxu0 0.0
        %323 = vmatprep.subr.mxu0 0.0
        %324 = vmatpush2.msra.mxu0 0.0
        %325 = vmatprep.mubr.f32.mxu0 0.0
        %326 = vmatmul.mubr.f32.gmra.mxu0 %v206
        %v327 = vpop.f32.mrf.mxu0
        %v328 = vadd.f32 %v259, %v327
        %v329 = vpop.f32.mrf.mxu0
        %330 = vmatprep.mubr.f32.mxu0 0.0
        %331 = vmatmul.mubr.f32.gmra.mxu0 %v207
        %v332 = vpop.f32.mrf.mxu0
        %v333 = vadd.f32 %v259, %v332
        %v334 = vpop.f32.mrf.mxu0
        %335 = vmatprep.mubr.f32.mxu0 0.0
        %336 = vmatmul.mubr.f32.gmra.mxu0 %v208
        %v337 = vpop.f32.mrf.mxu0
        %v338 = vadd.f32 %v259, %v337
        %v339 = vpop.f32.mrf.mxu0
        %340 = vmatprep.mubr.f32.mxu0 0.0
        %341 = vmatmul.mubr.f32.gmra.mxu0 %v209
        %v342 = vpop.f32.mrf.mxu0
        %v343 = vadd.f32 %v259, %v342
        %v344 = vpop.f32.mrf.mxu0
        %345 = vmatprep.mubr.f32.mxu0 0.0
        %346 = vmatmul.mubr.f32.gmra.mxu0 %v210
        %v347 = vpop.f32.mrf.mxu0
        %v348 = vadd.f32 %v259, %v347
        %v349 = vpop.f32.mrf.mxu0
        %350 = vmatprep.mubr.f32.mxu0 0.0
        %351 = vmatmul.mubr.f32.gmra.mxu0 %v211
        %v352 = vpop.f32.mrf.mxu0
        %v353 = vadd.f32 %v259, %v352
        %v354 = vpop.f32.mrf.mxu0
        %355 = vmatprep.mubr.f32.mxu0 0.0
        %356 = vmatmul.mubr.f32.gmra.mxu0 %v212
        %v357 = vpop.f32.mrf.mxu0
        %v358 = vadd.f32 %v259, %v357
        %v359 = vpop.f32.mrf.mxu0
        %360 = vmatprep.mubr.f32.mxu0 0.0
        %361 = vmatmul.mubr.f32.gmra.mxu0 %v213
        %v362 = vpop.f32.mrf.mxu0
        %v363 = vadd.f32 %v259, %v362
        %v364 = vpop.f32.mrf.mxu0
        %365 = vmatprep.mubr.f32.mxu0 0.0
        %366 = vmatmul.mubr.f32.gmra.mxu0 %v214
        %v367 = vpop.f32.mrf.mxu0
        %v368 = vadd.f32 %v259, %v367
        %v369 = vpop.f32.mrf.mxu0
        %370 = vmatprep.mubr.f32.mxu0 0.0
        %371 = vmatmul.mubr.f32.gmra.mxu0 %v215
        %v372 = vpop.f32.mrf.mxu0
        %v373 = vadd.f32 %v259, %v372
        %v374 = vpop.f32.mrf.mxu0
        %375 = vmatprep.mubr.f32.mxu0 0.0
        %376 = vmatmul.mubr.f32.gmra.mxu0 %v216
        %v377 = vpop.f32.mrf.mxu0
        %v378 = vadd.f32 %v259, %v377
        %v379 = vpop.f32.mrf.mxu0
        %380 = vmatprep.mubr.f32.mxu0 0.0
        %381 = vmatmul.mubr.f32.gmra.mxu0 %v217
        %v382 = vpop.f32.mrf.mxu0
        %v383 = vadd.f32 %v259, %v382
        %v384 = vpop.f32.mrf.mxu0
        %385 = vmatprep.mubr.f32.mxu0 0.0
        %386 = vmatmul.mubr.f32.gmra.mxu0 %v218
        %v387 = vpop.f32.mrf.mxu0
        %v388 = vadd.f32 %v259, %v387
        %v389 = vpop.f32.mrf.mxu0
        %390 = vmatprep.mubr.f32.mxu0 0.0
        %391 = vmatmul.mubr.f32.gmra.mxu0 %v219
        %v392 = vpop.f32.mrf.mxu0
        %v393 = vadd.f32 %v259, %v392
        %v394 = vpop.f32.mrf.mxu0
        %395 = vmatprep.mubr.f32.mxu0 0.0
        %396 = vmatmul.mubr.f32.gmra.mxu0 %v220
        %v397 = vpop.f32.mrf.mxu0
        %v398 = vadd.f32 %v259, %v397
        %v399 = vpop.f32.mrf.mxu0
        %400 = vmatprep.mubr.f32.mxu0 0.0
        %401 = vmatmul.mubr.f32.gmra.mxu0 %v221
        %v402 = vpop.f32.mrf.mxu0
        %v403 = vadd.f32 %v259, %v402
        %v404 = vpop.f32.mrf.mxu0
        %405 = vmatprep.mubr.f32.mxu0 0.0
        %406 = vmatmul.mubr.f32.gmra.mxu0 %v222
        %v407 = vpop.f32.mrf.mxu0
        %v408 = vadd.f32 %v259, %v407
        %v409 = vpop.f32.mrf.mxu0
        %410 = vmatprep.mubr.f32.mxu0 0.0
        %411 = vmatmul.mubr.f32.gmra.mxu0 %v223
        %v412 = vpop.f32.mrf.mxu0
        %v413 = vadd.f32 %v259, %v412
        %v414 = vpop.f32.mrf.mxu0
        %415 = vmatprep.mubr.f32.mxu0 0.0
        %416 = vmatmul.mubr.f32.gmra.mxu0 %v224
        %v417 = vpop.f32.mrf.mxu0
        %v418 = vadd.f32 %v259, %v417
        %v419 = vpop.f32.mrf.mxu0
        %420 = vmatprep.mubr.f32.mxu0 0.0
        %421 = vmatmul.mubr.f32.gmra.mxu0 %v225
        %v422 = vpop.f32.mrf.mxu0
        %v423 = vadd.f32 %v259, %v422
        %v424 = vpop.f32.mrf.mxu0
        %425 = vmatprep.mubr.f32.mxu0 0.0
        %426 = vmatmul.mubr.f32.gmra.mxu0 %v226
        %v427 = vpop.f32.mrf.mxu0
        %v428 = vadd.f32 %v259, %v427
        %v429 = vpop.f32.mrf.mxu0
        %430 = vmatprep.mubr.f32.mxu0 0.0
        %431 = vmatmul.mubr.f32.gmra.mxu0 %v227
        %v432 = vpop.f32.mrf.mxu0
        %v433 = vadd.f32 %v259, %v432
        %v434 = vpop.f32.mrf.mxu0
        %435 = vmatprep.mubr.f32.mxu0 0.0
        %436 = vmatmul.mubr.f32.gmra.mxu0 %v228
        %v437 = vpop.f32.mrf.mxu0
        %v438 = vadd.f32 %v259, %v437
        %v439 = vpop.f32.mrf.mxu0
        %440 = vmatprep.mubr.f32.mxu0 0.0
        %441 = vmatmul.mubr.f32.gmra.mxu0 %v229
        %v442 = vpop.f32.mrf.mxu0
        %v443 = vadd.f32 %v259, %v442
        %v444 = vpop.f32.mrf.mxu0
        %445 = vmatprep.mubr.f32.mxu0 0.0
        %446 = vmatmul.mubr.f32.gmra.mxu0 %v230
        %v447 = vpop.f32.mrf.mxu0
        %v448 = vadd.f32 %v259, %v447
        %v449 = vpop.f32.mrf.mxu0
        %450 = vmatprep.mubr.f32.mxu0 0.0
        %451 = vmatmul.mubr.f32.gmra.mxu0 %v231
        %v452 = vpop.f32.mrf.mxu0
        %v453 = vadd.f32 %v259, %v452
        %v454 = vpop.f32.mrf.mxu0
        %455 = vmatprep.mubr.f32.mxu0 0.0
        %456 = vmatmul.mubr.f32.gmra.mxu0 %v232
        %v457 = vpop.f32.mrf.mxu0
        %v458 = vadd.f32 %v259, %v457
        %v459 = vpop.f32.mrf.mxu0
        %460 = vmatprep.mubr.f32.mxu0 0.0
        %461 = vmatmul.mubr.f32.gmra.mxu0 %v233
        %v462 = vpop.f32.mrf.mxu0
        %v463 = vadd.f32 %v259, %v462
        %v464 = vpop.f32.mrf.mxu0
        %465 = vmatprep.mubr.f32.mxu0 0.0
        %466 = vmatmul.mubr.f32.gmra.mxu0 %v234
        %v467 = vpop.f32.mrf.mxu0
        %v468 = vadd.f32 %v259, %v467
        %v469 = vpop.f32.mrf.mxu0
        %470 = vmatprep.mubr.f32.mxu0 0.0
        %471 = vmatmul.mubr.f32.gmra.mxu0 %v235
        %v472 = vpop.f32.mrf.mxu0
        %v473 = vadd.f32 %v259, %v472
        %v474 = vpop.f32.mrf.mxu0
        %475 = vmatprep.mubr.f32.mxu0 0.0
        %476 = vmatmul.mubr.f32.gmra.mxu0 %v236
        %v477 = vpop.f32.mrf.mxu0
        %v478 = vadd.f32 %v259, %v477
        %v479 = vpop.f32.mrf.mxu0
        %480 = vmatprep.mubr.f32.mxu0 0.0
        %481 = vmatmul.mubr.f32.gmra.mxu0 %v237
        %v482 = vpop.f32.mrf.mxu0
        %v483 = vadd.f32 %v259, %v482
        %v484 = vpop.f32.mrf.mxu0
        %485 = vdwg.mxu0
        %486 = vst [vmem:[%s203] sm:$0xff] %v328
        %487 = vst [vmem:[%s203 + $0x8] sm:$0xff] %v333
        %488 = vst [vmem:[%s203 + $0x10] sm:$0xff] %v338
        %489 = vst [vmem:[%s203 + $0x18] sm:$0xff] %v343
        %490 = vst [vmem:[%s203 + $0x20] sm:$0xff] %v348
        %491 = vst [vmem:[%s203 + $0x28] sm:$0xff] %v353
        %492 = vst [vmem:[%s203 + $0x30] sm:$0xff] %v358
        %493 = vst [vmem:[%s203 + $0x38] sm:$0xff] %v363
        %494 = vst [vmem:[%s203 + $0x40] sm:$0xff] %v368
        %495 = vst [vmem:[%s203 + $0x48] sm:$0xff] %v373
        %496 = vst [vmem:[%s203 + $0x50] sm:$0xff] %v378
        %497 = vst [vmem:[%s203 + $0x58] sm:$0xff] %v383
        %498 = vst [vmem:[%s203 + $0x60] sm:$0xff] %v388
        %499 = vst [vmem:[%s203 + $0x68] sm:$0xff] %v393
        %500 = vst [vmem:[%s203 + $0x70] sm:$0xff] %v398
        %501 = vst [vmem:[%s203 + $0x78] sm:$0xff] %v403
        %502 = vst [vmem:[%s203 + $0x80] sm:$0xff] %v408
        %503 = vst [vmem:[%s203 + $0x88] sm:$0xff] %v413
        %504 = vst [vmem:[%s203 + $0x90] sm:$0xff] %v418
        %505 = vst [vmem:[%s203 + $0x98] sm:$0xff] %v423
        %506 = vst [vmem:[%s203 + $0xa0] sm:$0xff] %v428
        %507 = vst [vmem:[%s203 + $0xa8] sm:$0xff] %v433
        %508 = vst [vmem:[%s203 + $0xb0] sm:$0xff] %v438
        %509 = vst [vmem:[%s203 + $0xb8] sm:$0xff] %v443
        %510 = vst [vmem:[%s203 + $0xc0] sm:$0xff] %v448
        %511 = vst [vmem:[%s203 + $0xc8] sm:$0xff] %v453
        %512 = vst [vmem:[%s203 + $0xd0] sm:$0xff] %v458
        %513 = vst [vmem:[%s203 + $0xd8] sm:$0xff] %v463
        %514 = vst [vmem:[%s203 + $0xe0] sm:$0xff] %v468
        %515 = vst [vmem:[%s203 + $0xe8] sm:$0xff] %v473
        %516 = vst [vmem:[%s203 + $0xf0] sm:$0xff] %v478
        %517 = vst [vmem:[%s203 + $0xf8] sm:$0xff] %v483
        %s518 = sand.u32 %s97, 1
        %s519 = scalar_lea.sflag [#allocation4], %s518
        %s520 = sand.u32 %s97, 1
        %s521 = smul.addr %s520, 256
        %s522 = scalar_lea.vmem [#allocation7], %s521
        // Predicated region
        $region41: #{tpu_custom_call.1} parent=31 // pred_check
          %p523 = pneg %p107
        $region42: #{tpu_custom_call.1} parent=31 // pred_check_branch
          %525 = sbr.rel (%p523) target = $region44
        $region43: #{tpu_custom_call.1} parent=31 // pred_region
          %s526 = smul.u32 32, %s21
          %s528 = ssub.s32 4096, 4096
          %529 = vsyncadd %s519, %s528
          %s530 = smul.addr %s526, 128
          %s531 = scalar_lea.hbm %s3, %s530
          %s532 = sshll.u32 %s522, 4
          %s533 = int_to_ptr.vmem [resolvable:$true] %s532
          %538 = dma.vmem_to_hbm [thread:$0]  %s533, 4096, %s531, %s519, 128, 128, 8
        $region44: #{tpu_custom_call.1} parent=31 // pred_fallthru
          _
      $region32: #{tpu_custom_call.1} parent=5 // pred_fallthru
        _
      %p539 = scmp.le.s32.totalorder 2, %s16
      // Predicated region
      $region45: #{tpu_custom_call.1} parent=5 // pred_check
        %p540 = pneg %p539
      $region46: #{tpu_custom_call.1} parent=5 // pred_check_branch
        %542 = sbr.rel (%p540) target = $region48
      $region47: #{tpu_custom_call.1} parent=5 // pred_region
        %s543 = ssub.s32 %s16, 2
        // Predicated region
        $region49: #{tpu_custom_call.1} parent=47 // pred_check
          %p544 = pneg %p113
        $region50: #{tpu_custom_call.1} parent=47 // pred_check_branch
          %546 = sbr.rel (%p544) target = $region52
        $region51: #{tpu_custom_call.1} parent=47 // pred_region
          %s547 = sand.u32 %s98, 1
          %s548 = scalar_lea.sflag [#allocation4], %s547
          %s549 = sand.u32 %s98, 1
          %s550 = smul.addr %s549, 256
          %s551 = scalar_lea.vmem [#allocation7], %s550
          %552 = dma.done %s548, 4096
        $region52: #{tpu_custom_call.1} parent=47 // pred_fallthru
          _
      $region48: #{tpu_custom_call.1} parent=5 // pred_fallthru
        _
    $region6: #{tpu_custom_call.1} parent=1 // loop_footer
      %s20 = sadd.s32 1, %s16
    $region7: #{tpu_custom_call.1} parent=1 // loop_footer_branch
      %15 = sbr.rel target = $region3
    $region8: #{tpu_custom_call.1} parent=1 // loop_exit
      _
    %553 = vsyncpa [#allocation3], 1
    %s554 = scalar_lea.sflag [#allocation3], 1
    %555 = vsyncpa %s554, 1
    %556 = vsyncpa [#allocation6], 1
    %557 = vsyncpa [#allocation4], 1
    %s558 = scalar_lea.sflag [#allocation4], 1
    %559 = vsyncpa %s558, 1

</llo_original>
